<compile_context>
chip_gen: v5e
topology: v5e:2x2
jax: 0.10.0
libtpu: 0.0.40
codegen_flags: <defaults>
</compile_context>

<pallas_src>
import functools
import math

import jax
import jax.numpy as jnp
from jax.experimental import pallas as pl
from jax.experimental.pallas import tpu as pltpu


_SUBLANE = 8


def _round_up(x, m):
    return ((x + m - 1) // m) * m


def _cdiv(a, b):
    return -(-a // b)


# ---------------------------------------------------------------------------
# Kernel
# ---------------------------------------------------------------------------

def _vae_kernel(h_ref, eps_ref,
                w_enc_ref, b_enc_ref,
                w_d1h_ref, w_d1z_ref, b_d1_ref,
                w_d2_ref, b_d2_ref,
                y_ref, zmu_ref, zls_ref,
                *, emb):
    """One batch block of the full VAE forward."""
    dot_dtype = w_enc_ref.dtype          # bf16 (or f32 if configured so)
    h = h_ref[...]                       # f32 (TB, h_size)
    h_c = h.astype(dot_dtype)

    # Fused encoder: [z_mu | z_lsgms] = h @ [W11^T | W12^T] + [b11 | b12]
    # (one MXU push; bias add in f32 on the f32 accumulator).
    hz = jnp.dot(h_c, w_enc_ref[...],
                 preferred_element_type=jnp.float32) + b_enc_ref[...]
    z_mu = hz[:, :emb]
    z_lsgms = hz[:, emb:]

    # Reparameterization in f32: z = eps * exp(0.5 * log sigma^2) + mu.
    z = eps_ref[...] * jnp.exp(0.5 * z_lsgms) + z_mu

    # decode_1(cat(h, z)): two dots accumulated into one f32 result — no
    # lane-concat buffer (saves a TB x (h+emb) VMEM copy and vst slots).
    y1 = (jnp.dot(h_c, w_d1h_ref[...], preferred_element_type=jnp.float32)
          + jnp.dot(z.astype(dot_dtype), w_d1z_ref[...],
                    preferred_element_type=jnp.float32)
          + b_d1_ref[...])
    y1 = jnp.maximum(y1, 0.0)            # ReLU in f32

    # decode_2
    y = jnp.dot(y1.astype(dot_dtype), w_d2_ref[...],
                preferred_element_type=jnp.float32) + b_d2_ref[...]

    y_ref[...] = y
    zmu_ref[...] = z_mu
    zls_ref[...] = z_lsgms


# ---------------------------------------------------------------------------
# Wrapper
# ---------------------------------------------------------------------------

def _choose_batch_tile(B, tb_cap=1024):
    """Batch tile: multiple of 8 sublanes; >=2 blocks when B >= 16 so both v7x
    TensorCores engage; at most TB-8 rows of padding for awkward batch sizes."""
    n_blocks = max(1, _cdiv(B, tb_cap))
    if n_blocks < 2 and B >= 2 * _SUBLANE:
        n_blocks = 2
    return _round_up(_cdiv(B, n_blocks), _SUBLANE)


def mlp_vae_conditional_plain(h, eps, params):
    """Full VAE forward in one Pallas kernel, gridded over the batch axis.

    No wrapper-side pad/slice ops: inputs go in unpadded and the three results
    come out as separate, exactly-shaped arrays.
    """
    B, h_size = h.shape
    emb = params["emb"]
    y_size = params["y_size"]
    assert eps.shape == (B, emb)

    TB = _choose_batch_tile(B)
    grid = (_cdiv(B, TB),)

    weights = [params[k] for k in
               ("w_enc", "b_enc", "w_d1h", "w_d1z", "b_d1", "w_d2", "b_d2")]

    # Explicit VMEM budget: double-buffered activation/output tiles + resident
    # weights, plus headroom, clamped to v7x's 64 MiB physical VMEM.
    act_bytes = TB * (h_size + emb) * 4
    out_bytes = TB * (y_size + 2 * emb) * 4
    w_bytes = sum(int(a.size) * a.dtype.itemsize for a in weights)
    vmem_limit = 2 * (act_bytes + out_bytes + w_bytes) + (4 << 20)
    vmem_limit = max(16 << 20, min(int(vmem_limit), 64 << 20))

    def batch_spec(width):
        return pl.BlockSpec((TB, width), lambda i: (i, 0))

    def resident(shape):
        # Constant index_map -> weight tile stays VMEM-resident across grid steps.
        return pl.BlockSpec(shape, lambda i: (0, 0))

    kernel = functools.partial(_vae_kernel, emb=emb)

    y, z_mu, z_lsgms = pl.pallas_call(
        kernel,
        out_shape=(jax.ShapeDtypeStruct((B, y_size), jnp.float32),
                   jax.ShapeDtypeStruct((B, emb), jnp.float32),
                   jax.ShapeDtypeStruct((B, emb), jnp.float32)),
        grid=grid,
        in_specs=[
            batch_spec(h_size),                  # h
            batch_spec(emb),                     # eps
            resident((h_size, 2 * emb)),         # W_enc = [W11^T | W12^T] (bf16)
            resident((1, 2 * emb)),              # b_enc                   (f32)
            resident((h_size, emb)),             # W_d1 (h part)           (bf16)
            resident((emb, emb)),                # W_d1 (z part)           (bf16)
            resident((1, emb)),                  # b_d1                    (f32)
            resident((emb, y_size)),             # W_d2                    (bf16)
            resident((1, y_size)),               # b_d2                    (f32)
        ],
        out_specs=(batch_spec(y_size),
                   batch_spec(emb),
                   batch_spec(emb)),
        compiler_params=pltpu.CompilerParams(
            dimension_semantics=("parallel",),
            vmem_limit_bytes=vmem_limit),
    )(h, eps, *weights)

    return y, z_mu, z_lsgms


# ---------------------------------------------------------------------------
# Parameter construction (matches the PyTorch module's init) + packing.
# ---------------------------------------------------------------------------

def _xavier_uniform_relu(key, out_features, in_features):
    # torch.nn.init.xavier_uniform_ with gain = calculate_gain('relu') = sqrt(2)
    gain = math.sqrt(2.0)
    bound = gain * math.sqrt(6.0 / (in_features + out_features))
    return jax.random.uniform(key, (out_features, in_features),
                              minval=-bound, maxval=bound, dtype=jnp.float32)


def _linear_bias(key, out_features, in_features):
    # PyTorch nn.Linear default bias init: U(-1/sqrt(fan_in), 1/sqrt(fan_in))
    bound = 1.0 / math.sqrt(in_features)
    return jax.random.uniform(key, (1, out_features),
                              minval=-bound, maxval=bound, dtype=jnp.float32)


def pack_params(raw, h_size, emb, y_size, dot_dtype=jnp.bfloat16):
    """Pre-transpose to [in, out], fuse the encoder weights, split decode_1 into
    its h- and z-parts, and cast weights to the MXU operand dtype.  Biases stay
    f32 (added to the f32 accumulator)."""
    w_enc = jnp.concatenate([raw["w11"].T, raw["w12"].T], axis=1).astype(dot_dtype)
    b_enc = jnp.concatenate([raw["b11"], raw["b12"]], axis=1).astype(jnp.float32)
    w_d1h = raw["wd1"][:, :h_size].T.astype(dot_dtype)   # multiplies h
    w_d1z = raw["wd1"][:, h_size:].T.astype(dot_dtype)   # multiplies z
    w_d2 = raw["wd2"].T.astype(dot_dtype)
    return {
        "w_enc": w_enc, "b_enc": b_enc,
        "w_d1h": w_d1h, "w_d1z": w_d1z, "b_d1": raw["bd1"].astype(jnp.float32),
        "w_d2": w_d2, "b_d2": raw["bd2"].astype(jnp.float32),
        "h_size": h_size, "emb": emb, "y_size": y_size,
        "dot_dtype": dot_dtype,
    }


def init_params(key, h_size, embedding_size, y_size, dot_dtype=jnp.bfloat16):
    keys = jax.random.split(key, 8)
    raw = {
        "w11": _xavier_uniform_relu(keys[0], embedding_size, h_size),
        "b11": _linear_bias(keys[1], embedding_size, h_size),
        "w12": _xavier_uniform_relu(keys[2], embedding_size, h_size),
        "b12": _linear_bias(keys[3], embedding_size, h_size),
        "wd1": _xavier_uniform_relu(keys[4], embedding_size, embedding_size + h_size),
        "bd1": _linear_bias(keys[5], embedding_size, embedding_size + h_size),
        "wd2": _xavier_uniform_relu(keys[6], y_size, embedding_size),
        "bd2": _linear_bias(keys[7], y_size, embedding_size),
    }
    return raw, pack_params(raw, h_size, embedding_size, y_size, dot_dtype)


def reference_forward(h, eps, raw, h_size, dot_dtype=jnp.bfloat16):
    """Pure-JAX reference with the kernel's numerics: bf16 MXU operands,
    f32 accumulation, f32 elementwise (torch-layout weights)."""
    def dot(a, b):
        return jnp.dot(a.astype(dot_dtype), b.astype(dot_dtype),
                       preferred_element_type=jnp.float32)
    z_mu = dot(h, raw["w11"].T) + raw["b11"]
    z_lsgms = dot(h, raw["w12"].T) + raw["b12"]
    z = eps * jnp.exp(0.5 * z_lsgms) + z_mu
    y1 = jnp.maximum(dot(h, raw["wd1"][:, :h_size].T)
                     + dot(z, raw["wd1"][:, h_size:].T) + raw["bd1"], 0.0)
    y = dot(y1, raw["wd2"].T) + raw["bd2"]
    return y, z_mu, z_lsgms


if __name__ == "__main__":
    B, h_size, embedding_size, y_size = 8, 32, 32, 16

    key = jax.random.PRNGKey(0)
    k_params, k_h, k_eps = jax.random.split(key, 3)

    raw, packed = init_params(k_params, h_size, embedding_size, y_size)
    h = jax.random.normal(k_h, (B, h_size), dtype=jnp.float32)
    # eps corresponds to torch.randn(z_sgm.shape) inside the original forward;
    # it is generated with the JAX PRNG and passed in explicitly.
    eps = jax.random.normal(k_eps, (B, embedding_size), dtype=jnp.float32)

    y, z_mu, z_lsgms = mlp_vae_conditional_plain(h, eps, packed)
    jax.block_until_ready((y, z_mu, z_lsgms))

    assert y.shape == (B, y_size)
    assert z_mu.shape == (B, embedding_size)
    assert z_lsgms.shape == (B, embedding_size)

    # Precision-matched reference (same bf16 dot operands / f32 accumulation as
    # the kernel); drift vs. pure-f32 torch is at the ~1e-2 level by design.
    y_ref, zmu_ref, zls_ref = reference_forward(h, eps, raw, h_size)
    assert jnp.allclose(z_mu, zmu_ref, atol=1e-4, rtol=1e-4)
    assert jnp.allclose(z_lsgms, zls_ref, atol=1e-4, rtol=1e-4)
    assert jnp.allclose(y, y_ref, atol=1e-4, rtol=1e-4)

    print("KERNEL_OK")
</pallas_src>

<mosaic_0001>
module attributes {stable_mosaic.version = 11 : i64} {
  func.func @_vae_kernel(%arg0: i32, %arg1: memref<8x32xf32, #tpu.memory_space<vmem>>, %arg2: memref<8x32xf32, #tpu.memory_space<vmem>>, %arg3: memref<32x64xbf16, #tpu.memory_space<vmem>>, %arg4: memref<1x64xf32, #tpu.memory_space<vmem>>, %arg5: memref<32x32xbf16, #tpu.memory_space<vmem>>, %arg6: memref<32x32xbf16, #tpu.memory_space<vmem>>, %arg7: memref<1x32xf32, #tpu.memory_space<vmem>>, %arg8: memref<32x16xbf16, #tpu.memory_space<vmem>>, %arg9: memref<1x16xf32, #tpu.memory_space<vmem>>, %arg10: memref<8x16xf32, #tpu.memory_space<vmem>>, %arg11: memref<8x32xf32, #tpu.memory_space<vmem>>, %arg12: memref<8x32xf32, #tpu.memory_space<vmem>>) attributes {dimension_semantics = [#tpu.dimension_semantics<parallel>], iteration_bounds = array<i64: 1>, scalar_prefetch = 0 : i64, scratch_operands = 0 : i64, tpu.core_type = #tpu.core_type<tc>, window_params = [{transform_indices = @transform_0, window_bounds = array<i64: 8, 32>}, {transform_indices = @transform_1, window_bounds = array<i64: 8, 32>}, {pipeline_mode = #tpu.pipeline_mode<synchronous>, transform_indices = @transform_2, window_bounds = array<i64: 32, 64>}, {pipeline_mode = #tpu.pipeline_mode<synchronous>, transform_indices = @transform_3, window_bounds = array<i64: 1, 64>}, {pipeline_mode = #tpu.pipeline_mode<synchronous>, transform_indices = @transform_4, window_bounds = array<i64: 32, 32>}, {pipeline_mode = #tpu.pipeline_mode<synchronous>, transform_indices = @transform_5, window_bounds = array<i64: 32, 32>}, {pipeline_mode = #tpu.pipeline_mode<synchronous>, transform_indices = @transform_6, window_bounds = array<i64: 1, 32>}, {pipeline_mode = #tpu.pipeline_mode<synchronous>, transform_indices = @transform_7, window_bounds = array<i64: 32, 16>}, {pipeline_mode = #tpu.pipeline_mode<synchronous>, transform_indices = @transform_8, window_bounds = array<i64: 1, 16>}, {transform_indices = @transform_9, window_bounds = array<i64: 8, 16>}, {transform_indices = @transform_10, window_bounds = array<i64: 8, 32>}, {transform_indices = @transform_11, window_bounds = array<i64: 8, 32>}]} {
    %c0 = arith.constant 0 : index
    %c0_0 = arith.constant 0 : index
    %0 = vector.load %arg1[%c0, %c0_0] : memref<8x32xf32, #tpu.memory_space<vmem>>, vector<8x32xf32>
    %1 = arith.truncf %0 : vector<8x32xf32> to vector<8x32xbf16>
    %c0_1 = arith.constant 0 : index
    %c0_2 = arith.constant 0 : index
    %2 = vector.load %arg3[%c0_1, %c0_2] : memref<32x64xbf16, #tpu.memory_space<vmem>>, vector<32x64xbf16>
    %cst = arith.constant dense<0.000000e+00> : vector<8x64xf32>
    %3 = tpu.matmul %1, %2, %cst {dimension_numbers = #tpu.dot_dimension_numbers<[1], [0], [0], [1], [0, 0, 1, 1], [], []>} : vector<8x32xbf16>, vector<32x64xbf16>, vector<8x64xf32> -> vector<8x64xf32>
    %c0_3 = arith.constant 0 : index
    %c0_4 = arith.constant 0 : index
    %4 = vector.load %arg4[%c0_3, %c0_4] : memref<1x64xf32, #tpu.memory_space<vmem>>, vector<1x64xf32>
    %5 = vector.broadcast %4 : vector<1x64xf32> to vector<8x64xf32>
    %6 = arith.addf %3, %5 : vector<8x64xf32>
    %7 = vector.extract_strided_slice %6 {offsets = [0, 0], sizes = [8, 32], strides = [1, 1]} : vector<8x64xf32> to vector<8x32xf32>
    %8 = vector.extract_strided_slice %6 {offsets = [0, 32], sizes = [8, 32], strides = [1, 1]} : vector<8x64xf32> to vector<8x32xf32>
    %c0_5 = arith.constant 0 : index
    %c0_6 = arith.constant 0 : index
    %9 = vector.load %arg2[%c0_5, %c0_6] : memref<8x32xf32, #tpu.memory_space<vmem>>, vector<8x32xf32>
    %cst_7 = arith.constant 5.000000e-01 : f32
    %10 = vector.broadcast %cst_7 : f32 to vector<8x32xf32>
    %11 = arith.mulf %10, %8 : vector<8x32xf32>
    %12 = math.exp %11 : vector<8x32xf32>
    %13 = arith.mulf %9, %12 : vector<8x32xf32>
    %14 = arith.addf %13, %7 : vector<8x32xf32>
    %c0_8 = arith.constant 0 : index
    %c0_9 = arith.constant 0 : index
    %15 = vector.load %arg5[%c0_8, %c0_9] : memref<32x32xbf16, #tpu.memory_space<vmem>>, vector<32x32xbf16>
    %cst_10 = arith.constant dense<0.000000e+00> : vector<8x32xf32>
    %16 = tpu.matmul %1, %15, %cst_10 {dimension_numbers = #tpu.dot_dimension_numbers<[1], [0], [0], [1], [0, 0, 1, 1], [], []>} : vector<8x32xbf16>, vector<32x32xbf16>, vector<8x32xf32> -> vector<8x32xf32>
    %17 = arith.truncf %14 : vector<8x32xf32> to vector<8x32xbf16>
    %c0_11 = arith.constant 0 : index
    %c0_12 = arith.constant 0 : index
    %18 = vector.load %arg6[%c0_11, %c0_12] : memref<32x32xbf16, #tpu.memory_space<vmem>>, vector<32x32xbf16>
    %cst_13 = arith.constant dense<0.000000e+00> : vector<8x32xf32>
    %19 = tpu.matmul %17, %18, %cst_13 {dimension_numbers = #tpu.dot_dimension_numbers<[1], [0], [0], [1], [0, 0, 1, 1], [], []>} : vector<8x32xbf16>, vector<32x32xbf16>, vector<8x32xf32> -> vector<8x32xf32>
    %20 = arith.addf %16, %19 : vector<8x32xf32>
    %c0_14 = arith.constant 0 : index
    %c0_15 = arith.constant 0 : index
    %21 = vector.load %arg7[%c0_14, %c0_15] : memref<1x32xf32, #tpu.memory_space<vmem>>, vector<1x32xf32>
    %22 = vector.broadcast %21 : vector<1x32xf32> to vector<8x32xf32>
    %23 = arith.addf %20, %22 : vector<8x32xf32>
    %cst_16 = arith.constant 0.000000e+00 : f32
    %24 = vector.broadcast %cst_16 : f32 to vector<8x32xf32>
    %25 = arith.maximumf %23, %24 : vector<8x32xf32>
    %26 = arith.truncf %25 : vector<8x32xf32> to vector<8x32xbf16>
    %c0_17 = arith.constant 0 : index
    %c0_18 = arith.constant 0 : index
    %27 = vector.load %arg8[%c0_17, %c0_18] : memref<32x16xbf16, #tpu.memory_space<vmem>>, vector<32x16xbf16>
    %cst_19 = arith.constant dense<0.000000e+00> : vector<8x16xf32>
    %28 = tpu.matmul %26, %27, %cst_19 {dimension_numbers = #tpu.dot_dimension_numbers<[1], [0], [0], [1], [0, 0, 1, 1], [], []>} : vector<8x32xbf16>, vector<32x16xbf16>, vector<8x16xf32> -> vector<8x16xf32>
    %c0_20 = arith.constant 0 : index
    %c0_21 = arith.constant 0 : index
    %29 = vector.load %arg9[%c0_20, %c0_21] : memref<1x16xf32, #tpu.memory_space<vmem>>, vector<1x16xf32>
    %30 = vector.broadcast %29 : vector<1x16xf32> to vector<8x16xf32>
    %31 = arith.addf %28, %30 : vector<8x16xf32>
    %c0_22 = arith.constant 0 : index
    %c0_23 = arith.constant 0 : index
    %32 = vector.load %arg10[%c0_22, %c0_23] : memref<8x16xf32, #tpu.memory_space<vmem>>, vector<8x16xf32>
    tpu.vector_store %arg10[%c0_22, %c0_23], %31 {strides = array<i32>} : memref<8x16xf32, #tpu.memory_space<vmem>>, vector<8x16xf32>,
    %c0_24 = arith.constant 0 : index
    %c0_25 = arith.constant 0 : index
    %33 = vector.load %arg11[%c0_24, %c0_25] : memref<8x32xf32, #tpu.memory_space<vmem>>, vector<8x32xf32>
    tpu.vector_store %arg11[%c0_24, %c0_25], %7 {strides = array<i32>} : memref<8x32xf32, #tpu.memory_space<vmem>>, vector<8x32xf32>,
    %c0_26 = arith.constant 0 : index
    %c0_27 = arith.constant 0 : index
    %34 = vector.load %arg12[%c0_26, %c0_27] : memref<8x32xf32, #tpu.memory_space<vmem>>, vector<8x32xf32>
    tpu.vector_store %arg12[%c0_26, %c0_27], %8 {strides = array<i32>} : memref<8x32xf32, #tpu.memory_space<vmem>>, vector<8x32xf32>,
    return
  }
  func.func @transform_0(%arg0: i32) -> (i32, i32) {
    %c0_i32 = arith.constant 0 : i32
    %c0_i32_0 = arith.constant 0 : i32
    return %arg0, %c0_i32 : i32, i32
  }
  func.func @transform_1(%arg0: i32) -> (i32, i32) {
    %c0_i32 = arith.constant 0 : i32
    %c0_i32_0 = arith.constant 0 : i32
    return %arg0, %c0_i32 : i32, i32
  }
  func.func @transform_2(%arg0: i32) -> (i32, i32) {
    %c0_i32 = arith.constant 0 : i32
    %c0_i32_0 = arith.constant 0 : i32
    %c0_i32_1 = arith.constant 0 : i32
    return %c0_i32, %c0_i32_0 : i32, i32
  }
  func.func @transform_3(%arg0: i32) -> (i32, i32) {
    %c0_i32 = arith.constant 0 : i32
    %c0_i32_0 = arith.constant 0 : i32
    %c0_i32_1 = arith.constant 0 : i32
    return %c0_i32, %c0_i32_0 : i32, i32
  }
  func.func @transform_4(%arg0: i32) -> (i32, i32) {
    %c0_i32 = arith.constant 0 : i32
    %c0_i32_0 = arith.constant 0 : i32
    %c0_i32_1 = arith.constant 0 : i32
    return %c0_i32, %c0_i32_0 : i32, i32
  }
  func.func @transform_5(%arg0: i32) -> (i32, i32) {
    %c0_i32 = arith.constant 0 : i32
    %c0_i32_0 = arith.constant 0 : i32
    %c0_i32_1 = arith.constant 0 : i32
    return %c0_i32, %c0_i32_0 : i32, i32
  }
  func.func @transform_6(%arg0: i32) -> (i32, i32) {
    %c0_i32 = arith.constant 0 : i32
    %c0_i32_0 = arith.constant 0 : i32
    %c0_i32_1 = arith.constant 0 : i32
    return %c0_i32, %c0_i32_0 : i32, i32
  }
  func.func @transform_7(%arg0: i32) -> (i32, i32) {
    %c0_i32 = arith.constant 0 : i32
    %c0_i32_0 = arith.constant 0 : i32
    %c0_i32_1 = arith.constant 0 : i32
    return %c0_i32, %c0_i32_0 : i32, i32
  }
  func.func @transform_8(%arg0: i32) -> (i32, i32) {
    %c0_i32 = arith.constant 0 : i32
    %c0_i32_0 = arith.constant 0 : i32
    %c0_i32_1 = arith.constant 0 : i32
    return %c0_i32, %c0_i32_0 : i32, i32
  }
  func.func @transform_9(%arg0: i32) -> (i32, i32) {
    %c0_i32 = arith.constant 0 : i32
    %c0_i32_0 = arith.constant 0 : i32
    return %arg0, %c0_i32 : i32, i32
  }
  func.func @transform_10(%arg0: i32) -> (i32, i32) {
    %c0_i32 = arith.constant 0 : i32
    %c0_i32_0 = arith.constant 0 : i32
    return %arg0, %c0_i32 : i32, i32
  }
  func.func @transform_11(%arg0: i32) -> (i32, i32) {
    %c0_i32 = arith.constant 0 : i32
    %c0_i32_0 = arith.constant 0 : i32
    return %arg0, %c0_i32 : i32, i32
  }
}

</mosaic_0001>

<llo_original>
// kernel: tpu_custom_call.1
$region0: #{tpu_custom_call.1}
  #allocation0 [shape = 'u32[]', space=smem, size = 0x4, offset = 0x4, fixed_abs, tag = 'smem constant byte address 0x4 - core index']
  #allocation1 [shape = 'u32[72,128]{1,0:T(1,128)}', space=vmem, size = 0x9000, scoped, tag = 'internal scratch']
  %s0 = inlined_call_operand.vmem [shape: f32[8,32], index: 0, kind: input, shape index: {}]
  %s1 = inlined_call_operand.hbm [shape: f32[8,32], index: 1, kind: input, shape index: {}]
  %s2 = inlined_call_operand.vmem [shape: bf16[32,64], index: 2, kind: input, shape index: {}]
  %s3 = inlined_call_operand.vmem [shape: f32[1,64], index: 3, kind: input, shape index: {}]
  %s4 = inlined_call_operand.hbm [shape: bf16[32,32], index: 4, kind: input, shape index: {}]
  %s5 = inlined_call_operand.hbm [shape: bf16[32,32], index: 5, kind: input, shape index: {}]
  %s6 = inlined_call_operand.vmem [shape: f32[1,32], index: 6, kind: input, shape index: {}]
  %s7 = inlined_call_operand.vmem [shape: bf16[32,16], index: 7, kind: input, shape index: {}]
  %s8 = inlined_call_operand.vmem [shape: f32[1,16], index: 8, kind: input, shape index: {}]
  %s9 = inlined_call_operand.hbm [shape: f32[8,16], index: 9, kind: output, shape index: {0}]
  %s10 = inlined_call_operand.hbm [shape: f32[8,32], index: 10, kind: output, shape index: {1}]
  %s11 = inlined_call_operand.hbm [shape: f32[8,32], index: 11, kind: output, shape index: {2}]
  %12 = xla_tuple %s9, %s10, %s11
  %s13 = sld [smem:[#allocation0]]
  $region74: #{tpu_custom_call.1} parent=0
    _
  %s15 = ssub.s32 1, %s13
  %s16 = scalar_select 0, %s15, %s13
  $region1: #{tpu_custom_call.1} parent=0
    #allocation2 [shape = 'u8[4096]{0}', space=vmem, size = 0x1000, scoped, tag = 'input window, operand 1, single buffered']
    #allocation3 [shape = 's32[1]{0}', space=sflag, size = 0x4, scoped, tag = 'scoped memory for tpu_custom_call.1']
    #allocation4 [shape = 's32[1]{0}', space=sflag, size = 0x4, scoped, tag = 'scoped memory for tpu_custom_call.1']
    #allocation5 [shape = 'u8[8192]{0}', space=vmem, size = 0x2000, scoped, tag = 'input window, operand 4, single buffered']
    #allocation6 [shape = 's32[1]{0}', space=sflag, size = 0x4, scoped, tag = 'scoped memory for tpu_custom_call.1']
    #allocation7 [shape = 'u8[8192]{0}', space=vmem, size = 0x2000, scoped, tag = 'input window, operand 5, single buffered']
    #allocation8 [shape = 'u8[4096]{0}', space=vmem, size = 0x1000, scoped, tag = 'output window, operand 0, single buffered']
    #allocation9 [shape = 'u8[4096]{0}', space=vmem, size = 0x1000, scoped, tag = 'output window, operand 1, single buffered']
    #allocation10 [shape = 's32[1]{0}', space=sflag, size = 0x4, scoped, tag = 'scoped memory for tpu_custom_call.1']
    #allocation11 [shape = 'u8[4096]{0}', space=vmem, size = 0x1000, scoped, tag = 'output window, operand 2, single buffered']
    %17 = vsyncpa [#allocation3], 0
    %18 = vsyncpa [#allocation6], 0
    %19 = vsyncpa [#allocation4], 0
    %20 = vsyncpa [#allocation10], 0
    // Predicated region
    $region2: #{tpu_custom_call.1} parent=1 // pred_check
      _
    $region3: #{tpu_custom_call.1} parent=1 // pred_check_branch
      %22 = sbr.rel (0) target = $region5
    $region4: #{tpu_custom_call.1} parent=1 // pred_region
      _
    $region5: #{tpu_custom_call.1} parent=1 // pred_fallthru
      _
    // Predicated region
    $region6: #{tpu_custom_call.1} parent=1 // pred_check
      _
    $region7: #{tpu_custom_call.1} parent=1 // pred_check_branch
      %24 = sbr.rel (0) target = $region9
    $region8: #{tpu_custom_call.1} parent=1 // pred_region
      %26 = vsyncadd [#allocation3], 0
      %s28 = sshll.u32 %s1, 4
      %s29 = int_to_ptr.hbm [resolvable:$true] %s28
      %s30 = sshll.u32 [#allocation2], 4
      %s31 = int_to_ptr.vmem [resolvable:$true] %s30
      %33 = dma.hbm_to_vmem [thread:$0]  %s29, 128, %s31, [#allocation3]
    $region9: #{tpu_custom_call.1} parent=1 // pred_fallthru
      _
    // Predicated region
    $region10: #{tpu_custom_call.1} parent=1 // pred_check
      _
    $region11: #{tpu_custom_call.1} parent=1 // pred_check_branch
      %35 = sbr.rel (0) target = $region13
    $region12: #{tpu_custom_call.1} parent=1 // pred_region
      _
    $region13: #{tpu_custom_call.1} parent=1 // pred_fallthru
      _
    // Predicated region
    $region14: #{tpu_custom_call.1} parent=1 // pred_check
      _
    $region15: #{tpu_custom_call.1} parent=1 // pred_check_branch
      %37 = sbr.rel (0) target = $region17
    $region16: #{tpu_custom_call.1} parent=1 // pred_region
      _
    $region17: #{tpu_custom_call.1} parent=1 // pred_fallthru
      _
    // Predicated region
    $region18: #{tpu_custom_call.1} parent=1 // pred_check
      _
    $region19: #{tpu_custom_call.1} parent=1 // pred_check_branch
      %39 = sbr.rel (0) target = $region21
    $region20: #{tpu_custom_call.1} parent=1 // pred_region
      %41 = vsyncadd [#allocation6], 0
      %s42 = sshll.u32 %s4, 4
      %s43 = int_to_ptr.hbm [resolvable:$true] %s42
      %s44 = sshll.u32 [#allocation5], 4
      %s45 = int_to_ptr.vmem [resolvable:$true] %s44
      %50 = dma.hbm_to_vmem [thread:$0]  %s43, 256, %s45, [#allocation6], 64, 64, 4
    $region21: #{tpu_custom_call.1} parent=1 // pred_fallthru
      _
    // Predicated region
    $region22: #{tpu_custom_call.1} parent=1 // pred_check
      _
    $region23: #{tpu_custom_call.1} parent=1 // pred_check_branch
      %52 = sbr.rel (0) target = $region25
    $region24: #{tpu_custom_call.1} parent=1 // pred_region
      %54 = vsyncadd [#allocation6], 0
      %s55 = sshll.u32 %s5, 4
      %s56 = int_to_ptr.hbm [resolvable:$true] %s55
      %s57 = sshll.u32 [#allocation7], 4
      %s58 = int_to_ptr.vmem [resolvable:$true] %s57
      %63 = dma.hbm_to_vmem [thread:$0]  %s56, 256, %s58, [#allocation6], 64, 64, 4
    $region25: #{tpu_custom_call.1} parent=1 // pred_fallthru
      _
    // Predicated region
    $region26: #{tpu_custom_call.1} parent=1 // pred_check
      _
    $region27: #{tpu_custom_call.1} parent=1 // pred_check_branch
      %65 = sbr.rel (0) target = $region29
    $region28: #{tpu_custom_call.1} parent=1 // pred_region
      _
    $region29: #{tpu_custom_call.1} parent=1 // pred_fallthru
      _
    // Predicated region
    $region30: #{tpu_custom_call.1} parent=1 // pred_check
      _
    $region31: #{tpu_custom_call.1} parent=1 // pred_check_branch
      %67 = sbr.rel (0) target = $region33
    $region32: #{tpu_custom_call.1} parent=1 // pred_region
      _
    $region33: #{tpu_custom_call.1} parent=1 // pred_fallthru
      _
    // Predicated region
    $region34: #{tpu_custom_call.1} parent=1 // pred_check
      _
    $region35: #{tpu_custom_call.1} parent=1 // pred_check_branch
      %69 = sbr.rel (0) target = $region37
    $region36: #{tpu_custom_call.1} parent=1 // pred_region
      _
    $region37: #{tpu_custom_call.1} parent=1 // pred_fallthru
      _
    // Predicated region
    $region38: #{tpu_custom_call.1} parent=1 // pred_check
      _
    $region39: #{tpu_custom_call.1} parent=1 // pred_check_branch
      %71 = sbr.rel (0) target = $region41
    $region40: #{tpu_custom_call.1} parent=1 // pred_region
      %73 = dma.done [#allocation3], 128
    $region41: #{tpu_custom_call.1} parent=1 // pred_fallthru
      _
    // Predicated region
    $region42: #{tpu_custom_call.1} parent=1 // pred_check
      _
    $region43: #{tpu_custom_call.1} parent=1 // pred_check_branch
      %75 = sbr.rel (0) target = $region45
    $region44: #{tpu_custom_call.1} parent=1 // pred_region
      %77 = dma.done [#allocation6], 256
    $region45: #{tpu_custom_call.1} parent=1 // pred_fallthru
      _
    // Predicated region
    $region46: #{tpu_custom_call.1} parent=1 // pred_check
      _
    $region47: #{tpu_custom_call.1} parent=1 // pred_check_branch
      %79 = sbr.rel (0) target = $region49
    $region48: #{tpu_custom_call.1} parent=1 // pred_region
      %81 = dma.done [#allocation6], 256
    $region49: #{tpu_custom_call.1} parent=1 // pred_fallthru
      _
    %v83 = vld [vmem:[%s0] sm:$0xff]
    %v84 = vpack.c.bf16 %v83, %v83
    %v85 = vld [vmem:[%s2] sm:$0xf]
    %v86 = vld [vmem:[%s2 + $0x4] sm:$0xf]
    %v87 = vld [vmem:[%s2 + $0x8] sm:$0xf]
    %v88 = vld [vmem:[%s2 + $0xc] sm:$0xf]
    %v89 = vld [vmem:[%s3] sm:$0x1]
    %v91 = vperm.slane %v89, 0
    %v97 = vunpack.c.l.b16 %v85
    %v98 = vunpack.c.l.b16 %v86
    %v99 = vunpack.c.l.b16 %v87
    %v100 = vunpack.c.l.b16 %v88
    %v101 = vpack.c.b16 %v98, %v97
    %v102 = vpack.c.b16 %v100, %v99
    %vm105 = vcmask 261120
    %v107 = vsel %vm105, %v84, 0
    %109 = vmatpush.bf16.msra.mxu0 0
    %110 = vmatpush.bf16.msra.mxu0 0
    %111 = vmatpush.bf16.msra.mxu0 0
    %112 = vmatpush.bf16.msra.mxu0 0
    %113 = vmatpush.bf16.msra.mxu0 0
    %114 = vmatpush.bf16.msra.mxu0 0
    %115 = vmatpush.bf16.msra.mxu0 %v102
    %116 = vmatpush.bf16.msra.mxu0 %v101
    %117 = vmatmul.bf16.gmra.mxu0 %v107
    %v118 = vpop.f32.mrf.mxu0
    %v119 = vadd.f32 %v91, %v118
    %v120 = vpop.f32.mrf.mxu0
    %121 = vdwg.mxu0
    %v122 = vld [vmem:[#allocation2] sm:$0xff]
    %v123 = vmul.f32 %v119, 0.5
    %v124 = vmul.f32 %v123, 1.442695
    %v125 = vpow.pop %v124
    %127 = vrot.lane.b32.xlu0 %v125, 96
    %v128 = vpop.permute.xlu0 %127
    %v130 = vmul.f32 %v122, %v128
    %v131 = vadd.f32 %v130, %v119
    %v132 = vld [vmem:[#allocation5] sm:$0xf]
    %v133 = vld [vmem:[#allocation5 + $0x4] sm:$0xf]
    %v134 = vld [vmem:[#allocation5 + $0x8] sm:$0xf]
    %v135 = vld [vmem:[#allocation5 + $0xc] sm:$0xf]
    %v136 = vpack.c.bf16 %v131, %v131
    %v137 = vld [vmem:[#allocation7] sm:$0xf]
    %v138 = vld [vmem:[#allocation7 + $0x4] sm:$0xf]
    %v139 = vld [vmem:[#allocation7 + $0x8] sm:$0xf]
    %v140 = vld [vmem:[#allocation7 + $0xc] sm:$0xf]
    %v145 = vunpack.c.l.b16 %v137
    %v146 = vunpack.c.l.b16 %v138
    %v147 = vunpack.c.l.b16 %v139
    %v148 = vunpack.c.l.b16 %v140
    %v149 = vpack.c.b16 %v146, %v145
    %v150 = vpack.c.b16 %v148, %v147
    %v154 = vsel %vm105, %v136, 0
    %156 = vmatpush.bf16.msra.mxu0 0
    %157 = vmatpush.bf16.msra.mxu0 0
    %158 = vmatpush.bf16.msra.mxu0 0
    %159 = vmatpush.bf16.msra.mxu0 0
    %160 = vmatpush.bf16.msra.mxu0 0
    %161 = vmatpush.bf16.msra.mxu0 0
    %162 = vmatpush.bf16.msra.mxu0 %v150
    %163 = vmatpush.bf16.msra.mxu0 %v149
    %164 = vmatmul.bf16.gmra.mxu0 %v154
    %v165 = vpop.f32.mrf.mxu0
    %v166 = vadd.f32 0.0, %v165
    %v167 = vpop.f32.mrf.mxu0
    %168 = vdwg.mxu0
    %v173 = vunpack.c.l.b16 %v132
    %v174 = vunpack.c.l.b16 %v133
    %v175 = vunpack.c.l.b16 %v134
    %v176 = vunpack.c.l.b16 %v135
    %v177 = vpack.c.b16 %v174, %v173
    %v178 = vpack.c.b16 %v176, %v175
    %181 = vmatpush.bf16.msra.mxu0 0
    %182 = vmatpush.bf16.msra.mxu0 0
    %183 = vmatpush.bf16.msra.mxu0 0
    %184 = vmatpush.bf16.msra.mxu0 0
    %185 = vmatpush.bf16.msra.mxu0 0
    %186 = vmatpush.bf16.msra.mxu0 0
    %187 = vmatpush.bf16.msra.mxu0 %v178
    %188 = vmatpush.bf16.msra.mxu0 %v177
    %189 = vmatmul.bf16.gmra.mxu0 %v107
    %v190 = vpop.f32.mrf.mxu0
    %v191 = vadd.f32 %v166, %v190
    %v192 = vpop.f32.mrf.mxu0
    %193 = vdwg.mxu0
    %v194 = vld [vmem:[%s6] sm:$0x1]
    %v196 = vperm.slane %v194, 0
    %v198 = vadd.f32 %v191, %v196
    %v199 = vmax.f32 %v198, 0.0
    %v200 = vpack.c.bf16 %v199, %v199
    %v201 = vld [vmem:[%s7] sm:$0xf]
    %v202 = vld [vmem:[%s7 + $0x4] sm:$0xf]
    %v203 = vld [vmem:[%s7 + $0x8] sm:$0xf]
    %v204 = vld [vmem:[%s7 + $0xc] sm:$0xf]
    %v205 = vld [vmem:[%s8] sm:$0x1]
    %v207 = vperm.slane %v205, 0
    %v213 = vunpack.c.l.b16 %v201
    %v214 = vunpack.c.l.b16 %v202
    %v215 = vunpack.c.l.b16 %v203
    %v216 = vunpack.c.l.b16 %v204
    %v217 = vpack.c.b16 %v214, %v213
    %v218 = vpack.c.b16 %v216, %v215
    %v222 = vsel %vm105, %v200, 0
    %224 = vmatpush.bf16.msra.mxu0 0
    %225 = vmatpush.bf16.msra.mxu0 0
    %226 = vmatpush.bf16.msra.mxu0 0
    %227 = vmatpush.bf16.msra.mxu0 0
    %228 = vmatpush.bf16.msra.mxu0 0
    %229 = vmatpush.bf16.msra.mxu0 0
    %230 = vmatpush.bf16.msra.mxu0 %v218
    %231 = vmatpush.bf16.msra.mxu0 %v217
    %232 = vmatmul.bf16.gmra.mxu0 %v222
    %v233 = vpop.f32.mrf.mxu0
    %v234 = vadd.f32 %v207, %v233
    %v235 = vpop.f32.mrf.mxu0
    %236 = vdwg.mxu0
    %vm237 = vcmask 130048
    %238 = vst.msk [vmem:[#allocation8] sm:$0xff] %vm237, %v234
    %239 = vst.msk [vmem:[#allocation9] sm:$0xff] %vm105, %v119
    %241 = vrot.lane.b32.xlu0 %v119, 96
    %v242 = vpop.permute.xlu0 %241
    %244 = vst.msk [vmem:[#allocation11] sm:$0xff] %vm105, %v242
    // Predicated region
    $region50: #{tpu_custom_call.1} parent=1 // pred_check
      _
    $region51: #{tpu_custom_call.1} parent=1 // pred_check_branch
      %246 = sbr.rel (0) target = $region53
    $region52: #{tpu_custom_call.1} parent=1 // pred_region
      %248 = vsyncadd [#allocation4], 0
      %s250 = sshll.u32 [#allocation8], 4
      %s251 = int_to_ptr.vmem [resolvable:$true] %s250
      %s252 = sshll.u32 %s9, 4
      %s253 = int_to_ptr.hbm [resolvable:$true] %s252
      %255 = dma.vmem_to_hbm [thread:$0]  %s251, 128, %s253, [#allocation4]
    $region53: #{tpu_custom_call.1} parent=1 // pred_fallthru
      _
    // Predicated region
    $region54: #{tpu_custom_call.1} parent=1 // pred_check
      _
    $region55: #{tpu_custom_call.1} parent=1 // pred_check_branch
      %257 = sbr.rel (0) target = $region57
    $region56: #{tpu_custom_call.1} parent=1 // pred_region
      %259 = vsyncadd [#allocation10], 0
      %s261 = sshll.u32 [#allocation9], 4
      %s262 = int_to_ptr.vmem [resolvable:$true] %s261
      %s263 = sshll.u32 %s10, 4
      %s264 = int_to_ptr.hbm [resolvable:$true] %s263
      %266 = dma.vmem_to_hbm [thread:$0]  %s262, 128, %s264, [#allocation10]
    $region57: #{tpu_custom_call.1} parent=1 // pred_fallthru
      _
    // Predicated region
    $region58: #{tpu_custom_call.1} parent=1 // pred_check
      _
    $region59: #{tpu_custom_call.1} parent=1 // pred_check_branch
      %268 = sbr.rel (0) target = $region61
    $region60: #{tpu_custom_call.1} parent=1 // pred_region
      %270 = vsyncadd [#allocation10], 0
      %s272 = sshll.u32 [#allocation11], 4
      %s273 = int_to_ptr.vmem [resolvable:$true] %s272
      %s274 = sshll.u32 %s11, 4
      %s275 = int_to_ptr.hbm [resolvable:$true] %s274
      %277 = dma.vmem_to_hbm [thread:$0]  %s273, 128, %s275, [#allocation10]
    $region61: #{tpu_custom_call.1} parent=1 // pred_fallthru
      _
    // Predicated region
    $region62: #{tpu_custom_call.1} parent=1 // pred_check
      _
    $region63: #{tpu_custom_call.1} parent=1 // pred_check_branch
      %279 = sbr.rel (0) target = $region65
    $region64: #{tpu_custom_call.1} parent=1 // pred_region
      %281 = dma.done [#allocation4], 128
    $region65: #{tpu_custom_call.1} parent=1 // pred_fallthru
      _
    // Predicated region
    $region66: #{tpu_custom_call.1} parent=1 // pred_check
      _
    $region67: #{tpu_custom_call.1} parent=1 // pred_check_branch
      %283 = sbr.rel (0) target = $region69
    $region68: #{tpu_custom_call.1} parent=1 // pred_region
      %285 = dma.done [#allocation10], 128
    $region69: #{tpu_custom_call.1} parent=1 // pred_fallthru
      _
    // Predicated region
    $region70: #{tpu_custom_call.1} parent=1 // pred_check
      _
    $region71: #{tpu_custom_call.1} parent=1 // pred_check_branch
      %287 = sbr.rel (0) target = $region73
    $region72: #{tpu_custom_call.1} parent=1 // pred_region
      %289 = dma.done [#allocation10], 128
    $region73: #{tpu_custom_call.1} parent=1 // pred_fallthru
      _
    %290 = vsyncpa [#allocation3], 1
    %291 = vsyncpa [#allocation6], 1
    %292 = vsyncpa [#allocation4], 1
    %293 = vsyncpa [#allocation10], 1

</llo_original>
